<compile_context>
chip_gen: v5e
topology: v5e:2x2
jax: 0.10.0
libtpu: 0.0.40
codegen_flags: <defaults>
</compile_context>

<pallas_src>
import math

import jax
import jax.numpy as jnp
import numpy as np
from jax.experimental import pallas as pl
from jax.experimental.pallas import tpu as pltpu


def _round_up(x, m):
    return ((x + m - 1) // m) * m


def _cond_lip_linear_kernel(x_ref, wt_ref, mask_ref, scale_ref, b_ref, o_ref):
    """One (bm, bn) output tile, accumulated over the K (in_features) axis.

    x_ref     : (bm, bk)  bf16   input tile
    wt_ref    : (bk, bn)  bf16   W^T tile (canonical (K, N) operand)
    mask_ref  : (bk, 1)   f32    1.0 where the input feature is conditional
    scale_ref : (1, bn)   f32    precomputed per-output-row Lipschitz scale
    b_ref     : (1, bn)   f32    bias tile
    o_ref     : (bm, bn)  f32    output tile; resident across k -> accumulator
    """
    k = pl.program_id(2)

    # Output block index is constant across k, so o_ref stays in VMEM and acts
    # as the f32 accumulator.  Initialize with the bias at the first K step.
    @pl.when(k == 0)
    def _():
        o_ref[...] = jnp.broadcast_to(b_ref[...], o_ref.shape)

    # Effective weight for this K-tile: conditional rows of W^T are scaled by
    # the per-output-column Lipschitz scale.  Rescale math in f32 (cheap VPU
    # work), dot operands in bf16 for native MXU throughput.
    m = mask_ref[...]                                   # (bk, 1)
    s = scale_ref[...]                                  # (1, bn)
    factor = 1.0 + m * (s - 1.0)                        # (bk, bn) f32
    w_eff = (wt_ref[...].astype(jnp.float32) * factor).astype(jnp.bfloat16)

    o_ref[...] += jnp.dot(x_ref[...], w_eff, preferred_element_type=jnp.float32)


def prepare_cond_lip_params(weight, bias, c, cond_idcs, *, block_o=256, block_k=512):
    """One-time (per parameter update) preparation of the static operands.

    Pads, transposes and bf16-casts the weight, pads the bias, builds the
    conditional-column mask and precomputes softplus(c) and the per-row scale
    in f32 — so the per-call wrapper only touches `x`.
    """
    assert block_o % 128 == 0 and block_k % 128 == 0
    O, I = weight.shape
    bn = min(block_o, _round_up(O, 128))
    bk = min(block_k, _round_up(I, 128))
    Op = _round_up(O, bn)
    Ip = _round_up(I, bk)

    idx = jnp.asarray(cond_idcs, dtype=jnp.int32)
    w32 = weight.astype(jnp.float32)

    # Denominator computed exactly like PyTorch (duplicate indices are
    # double-counted, matching torch.abs(weight[:, cond_idcs]).sum(1)).
    denom = jnp.abs(w32[:, idx]).sum(axis=1)                        # (O,)
    lipc = jax.nn.softplus(c.astype(jnp.float32))[0]
    scale = jnp.minimum(lipc / denom, 1.0)                          # (O,) f32

    wt = jnp.pad(w32.T, ((0, Ip - I), (0, Op - O))).astype(jnp.bfloat16)
    bias_p = jnp.pad(bias.astype(jnp.float32), (0, Op - O)).reshape(1, Op)
    scale_p = jnp.pad(scale, (0, Op - O), constant_values=1.0).reshape(1, Op)
    mask = jnp.zeros((Ip, 1), jnp.float32).at[idx, 0].set(1.0)

    return dict(wt=wt, bias=bias_p, scale=scale_p, mask=mask,
                O=O, I=I, Op=Op, Ip=Ip, bn=bn, bk=bk)


def conditional_lipschitz_linear(x, params, *, block_b=256):
    """x: (B, I) float; params: output of prepare_cond_lip_params.  -> (B, O) f32."""
    assert block_b % 8 == 0
    B, I = x.shape
    assert I == params["I"], "in_features mismatch"
    O, Op, Ip = params["O"], params["Op"], params["Ip"]
    bn, bk = params["bn"], params["bk"]

    bm = min(block_b, _round_up(B, 8))
    Bp = _round_up(B, bm)

    # Only per-call data movement: pad + bf16-cast x (single fused XLA pass).
    x_p = jnp.pad(x.astype(jnp.bfloat16), ((0, Bp - B), (0, Ip - I)))

    grid = (Op // bn, Bp // bm, Ip // bk)   # (j out-tiles, i batch-tiles, k reduction)

    flops = 2 * Bp * Ip * Op
    bytes_accessed = ((Bp * Ip * 2) * (Op // bn)      # x re-streamed per out tile
                      + (Ip * Op * 2) * (Bp // bm)    # W^T re-streamed per batch tile
                      + Bp * Op * 4)                  # output

    out = pl.pallas_call(
        _cond_lip_linear_kernel,
        out_shape=jax.ShapeDtypeStruct((Bp, Op), jnp.float32),
        grid_spec=pltpu.PrefetchScalarGridSpec(
            num_scalar_prefetch=0,
            grid=grid,
            in_specs=[
                pl.BlockSpec((bm, bk), lambda j, i, k: (i, k)),   # x tile
                pl.BlockSpec((bk, bn), lambda j, i, k: (k, j)),   # W^T tile
                pl.BlockSpec((bk, 1), lambda j, i, k: (k, 0)),    # cond mask (column)
                pl.BlockSpec((1, bn), lambda j, i, k: (0, j)),    # per-row scale
                pl.BlockSpec((1, bn), lambda j, i, k: (0, j)),    # bias
            ],
            out_specs=pl.BlockSpec((bm, bn), lambda j, i, k: (i, j)),
        ),
        compiler_params=pltpu.CompilerParams(
            dimension_semantics=("parallel", "parallel", "arbitrary"),
            vmem_limit_bytes=32 * 1024 * 1024),
        cost_estimate=pl.CostEstimate(flops=flops, transcendentals=0,
                                      bytes_accessed=bytes_accessed),
    )(x_p, params["wt"], params["mask"], params["scale"], params["bias"])

    return out[:B, :O]


def _reference_f32(x, weight, bias, c, cond_idcs):
    """Pure-JAX f32 reference mirroring the PyTorch forward exactly."""
    idx = jnp.asarray(cond_idcs)
    lipc = jax.nn.softplus(c.astype(jnp.float32))[0]
    scale = jnp.minimum(lipc / jnp.abs(weight[:, idx]).sum(1), 1.0)
    w = weight.at[:, idx].set(weight[:, idx] * scale[:, None])
    return x @ w.T + bias[None, :]


def _reference_matched(x, weight, bias, c, cond_idcs):
    """Reference mirroring the kernel's bf16 operand rounding (tight check)."""
    idx = jnp.asarray(cond_idcs)
    lipc = jax.nn.softplus(c.astype(jnp.float32))[0]
    scale = jnp.minimum(lipc / jnp.abs(weight[:, idx]).sum(1), 1.0)       # (O,)
    mask = jnp.zeros((weight.shape[1],), jnp.float32).at[idx].set(1.0)    # (I,)
    factor = 1.0 + mask[None, :] * (scale[:, None] - 1.0)                 # (O, I)
    w_bf = weight.astype(jnp.bfloat16).astype(jnp.float32)
    w_eff = (w_bf * factor).astype(jnp.bfloat16).astype(jnp.float32)
    x_bf = x.astype(jnp.bfloat16).astype(jnp.float32)
    return x_bf @ w_eff.T + bias[None, :]


if __name__ == "__main__":
    # Small config; tile sizes chosen so the 3-D grid (2 output tiles x 3 batch
    # tiles x 2 K tiles), padding and the bias-init accumulator are exercised.
    in_features, out_features = 200, 160
    batch = 48
    cond_idcs = list(range(12))  # first 12 input features are "conditional"

    key = jax.random.PRNGKey(0)
    kw, kb, kx = jax.random.split(key, 3)

    # Deterministic parameter init mirroring initialize_parameters():
    bound_w = math.sqrt(6.0 / in_features)           # kaiming-uniform-like init_fn
    weight = jax.random.uniform(kw, (out_features, in_features), jnp.float32,
                                -bound_w, bound_w)
    stdv = 1.0 / math.sqrt(in_features)
    bias = jax.random.uniform(kb, (out_features,), jnp.float32, -stdv, stdv)
    c = jnp.max(jnp.abs(weight).sum(1)).reshape(1)   # c = max row-wise |W| sum

    x = jax.random.normal(kx, (batch, in_features), jnp.float32)

    params = prepare_cond_lip_params(weight, bias, c, cond_idcs,
                                     block_o=128, block_k=128)
    out = conditional_lipschitz_linear(x, params, block_b=16)
    out = jax.block_until_ready(out)

    # Tight check vs a bf16-operand-matched reference (catches real bugs).
    ref_m = _reference_matched(x, weight, bias, c, cond_idcs)
    np.testing.assert_allclose(np.asarray(out), np.asarray(ref_m),
                               rtol=1e-4, atol=1e-4)

    # Loose check vs the exact f32 PyTorch-semantics reference
    # (bf16 operands trade a little precision for 2-4x MXU/HBM throughput).
    ref = _reference_f32(x, weight, bias, c, cond_idcs)
    np.testing.assert_allclose(np.asarray(out), np.asarray(ref),
                               rtol=5e-2, atol=5e-2)

    print("KERNEL_OK")
</pallas_src>

<mosaic_0001>
module attributes {stable_mosaic.version = 11 : i64} {
  func.func @_cond_lip_linear_kernel(%arg0: i32, %arg1: i32, %arg2: i32, %arg3: memref<16x128xbf16, #tpu.memory_space<vmem>>, %arg4: memref<128x128xbf16, #tpu.memory_space<vmem>>, %arg5: memref<128x1xf32, #tpu.memory_space<vmem>>, %arg6: memref<1x128xf32, #tpu.memory_space<vmem>>, %arg7: memref<1x128xf32, #tpu.memory_space<vmem>>, %arg8: memref<16x128xf32, #tpu.memory_space<vmem>>) attributes {dimension_semantics = [#tpu.dimension_semantics<parallel>, #tpu.dimension_semantics<parallel>, #tpu.dimension_semantics<arbitrary>], iteration_bounds = array<i64: 2, 3, 2>, scalar_prefetch = 0 : i64, scratch_operands = 0 : i64, tpu.core_type = #tpu.core_type<tc>, window_params = [{transform_indices = @transform_0, window_bounds = array<i64: 16, 128>}, {transform_indices = @transform_1, window_bounds = array<i64: 128, 128>}, {transform_indices = @transform_2, window_bounds = array<i64: 128, 1>}, {transform_indices = @transform_3, window_bounds = array<i64: 1, 128>}, {transform_indices = @transform_4, window_bounds = array<i64: 1, 128>}, {transform_indices = @transform_5, window_bounds = array<i64: 16, 128>}]} {
    %c0_i32 = arith.constant 0 : i32
    %0 = arith.cmpi eq, %arg2, %c0_i32 : i32
    %1 = arith.extui %0 : i1 to i32
    %c0_i32_0 = arith.constant 0 : i32
    %2 = arith.cmpi ne, %1, %c0_i32_0 : i32
    scf.if %2 {
      %c0_14 = arith.constant 0 : index
      %c0_15 = arith.constant 0 : index
      %21 = vector.load %arg7[%c0_14, %c0_15] : memref<1x128xf32, #tpu.memory_space<vmem>>, vector<1x128xf32>
      %22 = vector.shape_cast %21 : vector<1x128xf32> to vector<1x128xf32>
      %23 = vector.broadcast %22 : vector<1x128xf32> to vector<16x128xf32>
      %c0_16 = arith.constant 0 : index
      %c0_17 = arith.constant 0 : index
      %24 = vector.load %arg8[%c0_16, %c0_17] : memref<16x128xf32, #tpu.memory_space<vmem>>, vector<16x128xf32>
      tpu.vector_store %arg8[%c0_16, %c0_17], %23 {strides = array<i32>} : memref<16x128xf32, #tpu.memory_space<vmem>>, vector<16x128xf32>,
    } else {
    }
    %c0 = arith.constant 0 : index
    %c0_1 = arith.constant 0 : index
    %3 = vector.load %arg5[%c0, %c0_1] : memref<128x1xf32, #tpu.memory_space<vmem>>, vector<128x1xf32>
    %c0_2 = arith.constant 0 : index
    %c0_3 = arith.constant 0 : index
    %4 = vector.load %arg6[%c0_2, %c0_3] : memref<1x128xf32, #tpu.memory_space<vmem>>, vector<1x128xf32>
    %cst = arith.constant 1.000000e+00 : f32
    %5 = vector.broadcast %cst : f32 to vector<1x128xf32>
    %6 = arith.subf %4, %5 : vector<1x128xf32>
    %7 = vector.broadcast %3 : vector<128x1xf32> to vector<128x128xf32>
    %8 = vector.broadcast %6 : vector<1x128xf32> to vector<128x128xf32>
    %9 = arith.mulf %7, %8 : vector<128x128xf32>
    %cst_4 = arith.constant 1.000000e+00 : f32
    %10 = vector.broadcast %cst_4 : f32 to vector<128x128xf32>
    %11 = arith.addf %10, %9 : vector<128x128xf32>
    %c0_5 = arith.constant 0 : index
    %c0_6 = arith.constant 0 : index
    %12 = vector.load %arg4[%c0_5, %c0_6] : memref<128x128xbf16, #tpu.memory_space<vmem>>, vector<128x128xbf16>
    %13 = arith.extf %12 : vector<128x128xbf16> to vector<128x128xf32>
    %14 = arith.mulf %13, %11 : vector<128x128xf32>
    %15 = arith.truncf %14 : vector<128x128xf32> to vector<128x128xbf16>
    %c0_7 = arith.constant 0 : index
    %c0_8 = arith.constant 0 : index
    %16 = vector.load %arg8[%c0_7, %c0_8] : memref<16x128xf32, #tpu.memory_space<vmem>>, vector<16x128xf32>
    %c0_9 = arith.constant 0 : index
    %c0_10 = arith.constant 0 : index
    %17 = vector.load %arg3[%c0_9, %c0_10] : memref<16x128xbf16, #tpu.memory_space<vmem>>, vector<16x128xbf16>
    %cst_11 = arith.constant dense<0.000000e+00> : vector<16x128xf32>
    %18 = tpu.matmul %17, %15, %cst_11 {dimension_numbers = #tpu.dot_dimension_numbers<[1], [0], [0], [1], [0, 0, 1, 1], [], []>} : vector<16x128xbf16>, vector<128x128xbf16>, vector<16x128xf32> -> vector<16x128xf32>
    %19 = arith.addf %16, %18 : vector<16x128xf32>
    %c0_12 = arith.constant 0 : index
    %c0_13 = arith.constant 0 : index
    %20 = vector.load %arg8[%c0_12, %c0_13] : memref<16x128xf32, #tpu.memory_space<vmem>>, vector<16x128xf32>
    tpu.vector_store %arg8[%c0_12, %c0_13], %19 {strides = array<i32>} : memref<16x128xf32, #tpu.memory_space<vmem>>, vector<16x128xf32>,
    return
  }
  func.func @transform_0(%arg0: i32, %arg1: i32, %arg2: i32) -> (i32, i32) {
    %c0_i32 = arith.constant 0 : i32
    return %arg1, %arg2 : i32, i32
  }
  func.func @transform_1(%arg0: i32, %arg1: i32, %arg2: i32) -> (i32, i32) {
    %c0_i32 = arith.constant 0 : i32
    return %arg2, %arg0 : i32, i32
  }
  func.func @transform_2(%arg0: i32, %arg1: i32, %arg2: i32) -> (i32, i32) {
    %c0_i32 = arith.constant 0 : i32
    %c0_i32_0 = arith.constant 0 : i32
    return %arg2, %c0_i32 : i32, i32
  }
  func.func @transform_3(%arg0: i32, %arg1: i32, %arg2: i32) -> (i32, i32) {
    %c0_i32 = arith.constant 0 : i32
    %c0_i32_0 = arith.constant 0 : i32
    return %c0_i32, %arg0 : i32, i32
  }
  func.func @transform_4(%arg0: i32, %arg1: i32, %arg2: i32) -> (i32, i32) {
    %c0_i32 = arith.constant 0 : i32
    %c0_i32_0 = arith.constant 0 : i32
    return %c0_i32, %arg0 : i32, i32
  }
  func.func @transform_5(%arg0: i32, %arg1: i32, %arg2: i32) -> (i32, i32) {
    %c0_i32 = arith.constant 0 : i32
    return %arg1, %arg0 : i32, i32
  }
}

</mosaic_0001>

<llo_original>
// kernel: tpu_custom_call.1
$region0: #{tpu_custom_call.1}
  #allocation0 [shape = 'u32[]', space=smem, size = 0x4, offset = 0x4, fixed_abs, tag = 'smem constant byte address 0x4 - core index']
  #allocation1 [shape = 'u32[72,128]{1,0:T(1,128)}', space=vmem, size = 0x9000, scoped, tag = 'internal scratch']
  %s0 = inlined_call_operand.hbm [shape: bf16[48,256], index: 0, kind: input, shape index: {}]
  %s1 = inlined_call_operand.vmem [shape: bf16[256,256], index: 1, kind: input, shape index: {}]
  %s2 = inlined_call_operand.vmem [shape: f32[256,1], index: 2, kind: input, shape index: {}]
  %s3 = inlined_call_operand.vmem [shape: f32[1,256], index: 3, kind: input, shape index: {}]
  %s4 = inlined_call_operand.vmem [shape: f32[1,256], index: 4, kind: input, shape index: {}]
  %s5 = inlined_call_operand.hbm [shape: f32[48,256], index: 5, kind: output, shape index: {}]
  %s6 = sld [smem:[#allocation0]]
  $region102: #{tpu_custom_call.1} parent=0
    _
  %s8 = ssub.s32 1, %s6
  %s9 = scalar_select 0, %s8, %s6
  $region1: #{tpu_custom_call.1} parent=0
    #allocation2 [shape = 'u8[8192]{0}', space=vmem, size = 0x2000, scoped, tag = 'input window, operand 0']
    #allocation3 [shape = 's32[2]{0}', space=sflag, size = 0x8, scoped, tag = 'scoped memory for tpu_custom_call.1']
    #allocation4 [shape = 's32[2]{0}', space=sflag, size = 0x8, scoped, tag = 'scoped memory for tpu_custom_call.1']
    #allocation5 [shape = 'u8[65536]{0}', space=vmem, size = 0x10000, scoped, tag = 'input window, operand 1']
    #allocation6 [shape = 'u8[16384]{0}', space=vmem, size = 0x4000, scoped, tag = 'output window, operand 0']
    %10 = vsyncpa [#allocation3], 0
    %s11 = scalar_lea.sflag [#allocation3], 1
    %12 = vsyncpa %s11, 0
    %13 = vsyncpa [#allocation4], 0
    %s14 = scalar_lea.sflag [#allocation4], 1
    %15 = vsyncpa %s14, 0
    loop: start=0, step=1, limit=14
    $region2: #{tpu_custom_call.1} parent=1 // loop_pre_header
      _
    $region3: #{tpu_custom_call.1} parent=1 // loop_header
      %s17 = sphi 0, %s21
      %p18 = scmp.ge.s32.totalorder %s17, 14
      %s24 = sphi 0, %s43
      %s25 = sphi 0, %s39
      %s26 = sphi 0, %s35
      %s27 = sphi 0, %s24
      %s28 = sphi 0, %s25
      %s29 = sphi 0, %s26
      %s30 = sphi 0, %s27
      %s31 = sphi 0, %s28
      %s32 = sphi 0, %s29
      %s48 = sphi 0, %s50
      %s51 = sphi 0, %s48
      %s52 = sphi 0, %s51
      %s68 = sphi 0, %s52
      %s76 = sphi 0, %s78
      %s79 = sphi 0, %s76
      %s80 = sphi 0, %s79
      %s96 = sphi 0, %s80
      %s102 = sphi 0, %s104
      %s105 = sphi 0, %s102
      %s106 = sphi 0, %s105
      %s122 = sphi 0, %s106
      %s128 = sphi 0, %s130
      %s131 = sphi 0, %s128
      %s132 = sphi 0, %s131
      %s148 = sphi 0, %s132
      %s154 = sphi 0, %s156
      %s157 = sphi 0, %s154
      %s158 = sphi 0, %s157
      %s174 = sphi 0, %s158
      %s182 = sphi 0, %s184
      %s185 = sphi 0, %s182
      %s186 = sphi 0, %s185
      %s202 = sphi 0, %s186
    $region4: #{tpu_custom_call.1} parent=1 // loop_header_branch
      %20 = sbr.rel (%p18) target = $region8
    $region5: #{tpu_custom_call.1} parent=1 // loop_body
      %s22 = ssub.s32 %s17, 1
      %s23 = ssub.s32 %s17, 2
      %s33 = sadd.s32 1, %s26
      %p34 = scmp.ge.s32.totalorder %s33, 2
      %s35 = scalar_select %p34, 0, %s33
      %s36 = sadd.s32 1, %s25
      %s37 = scalar_select %p34, %s36, %s25
      %p38 = scmp.ge.s32.totalorder %s37, 3
      %s39 = scalar_select %p38, 0, %s37
      %s40 = sadd.s32 1, %s24
      %s41 = scalar_select %p38, %s40, %s24
      %p42 = scmp.ge.s32.totalorder %s41, 2
      %s43 = scalar_select %p42, 0, %s41
      %s44 = ssub.s32 %s25, %s39
      %s45 = ssub.s32 %s26, %s35
      %s46 = sor.u32 %s44, %s45
      %p47 = scmp.eq.s32.totalorder %s46, 0
      %s49 = sadd.s32 %s48, 1
      %s50 = scalar_select %p47, %s48, %s49
      %p53 = pneg %p47
      %p54 = scmp.eq.s32.totalorder %s17, 11
      %p55 = por %p53, %p54
      %p56 = scmp.ne.s32.totalorder %s48, %s51
      %p57 = scmp.eq.s32.totalorder %s17, 0
      %p58 = por %p56, %p57
      %p59 = scmp.ne.s32.totalorder %s48, %s51
      %p60 = scmp.eq.s32.totalorder %s22, 11
      %p61 = por %p59, %p60
      %p62 = scmp.ne.s32.totalorder %s51, %s52
      %p63 = scmp.eq.s32.totalorder %s22, 0
      %p64 = por %p62, %p63
      %p65 = scmp.ne.s32.totalorder %s51, %s52
      %p66 = scmp.eq.s32.totalorder %s23, 11
      %p67 = por %p65, %p66
      %p69 = scmp.ne.s32.totalorder %s52, %s68
      %p70 = scmp.eq.s32.totalorder %s23, 0
      %p71 = por %p69, %p70
      %s72 = ssub.s32 %s26, %s35
      %s73 = ssub.s32 %s24, %s43
      %s74 = sor.u32 %s72, %s73
      %p75 = scmp.eq.s32.totalorder %s74, 0
      %s77 = sadd.s32 %s76, 1
      %s78 = scalar_select %p75, %s76, %s77
      %p81 = pneg %p75
      %p82 = scmp.eq.s32.totalorder %s17, 11
      %p83 = por %p81, %p82
      %p84 = scmp.ne.s32.totalorder %s76, %s79
      %p85 = scmp.eq.s32.totalorder %s17, 0
      %p86 = por %p84, %p85
      %p87 = scmp.ne.s32.totalorder %s76, %s79
      %p88 = scmp.eq.s32.totalorder %s22, 11
      %p89 = por %p87, %p88
      %p90 = scmp.ne.s32.totalorder %s79, %s80
      %p91 = scmp.eq.s32.totalorder %s22, 0
      %p92 = por %p90, %p91
      %p93 = scmp.ne.s32.totalorder %s79, %s80
      %p94 = scmp.eq.s32.totalorder %s23, 11
      %p95 = por %p93, %p94
      %p97 = scmp.ne.s32.totalorder %s80, %s96
      %p98 = scmp.eq.s32.totalorder %s23, 0
      %p99 = por %p97, %p98
      %s100 = ssub.s32 %s26, %s35
      %p101 = scmp.eq.s32.totalorder %s100, 0
      %s103 = sadd.s32 %s102, 1
      %s104 = scalar_select %p101, %s102, %s103
      %p107 = pneg %p101
      %p108 = scmp.eq.s32.totalorder %s17, 11
      %p109 = por %p107, %p108
      %p110 = scmp.ne.s32.totalorder %s102, %s105
      %p111 = scmp.eq.s32.totalorder %s17, 0
      %p112 = por %p110, %p111
      %p113 = scmp.ne.s32.totalorder %s102, %s105
      %p114 = scmp.eq.s32.totalorder %s22, 11
      %p115 = por %p113, %p114
      %p116 = scmp.ne.s32.totalorder %s105, %s106
      %p117 = scmp.eq.s32.totalorder %s22, 0
      %p118 = por %p116, %p117
      %p119 = scmp.ne.s32.totalorder %s105, %s106
      %p120 = scmp.eq.s32.totalorder %s23, 11
      %p121 = por %p119, %p120
      %p123 = scmp.ne.s32.totalorder %s106, %s122
      %p124 = scmp.eq.s32.totalorder %s23, 0
      %p125 = por %p123, %p124
      %s126 = ssub.s32 %s24, %s43
      %p127 = scmp.eq.s32.totalorder %s126, 0
      %s129 = sadd.s32 %s128, 1
      %s130 = scalar_select %p127, %s128, %s129
      %p133 = pneg %p127
      %p134 = scmp.eq.s32.totalorder %s17, 11
      %p135 = por %p133, %p134
      %p136 = scmp.ne.s32.totalorder %s128, %s131
      %p137 = scmp.eq.s32.totalorder %s17, 0
      %p138 = por %p136, %p137
      %p139 = scmp.ne.s32.totalorder %s128, %s131
      %p140 = scmp.eq.s32.totalorder %s22, 11
      %p141 = por %p139, %p140
      %p142 = scmp.ne.s32.totalorder %s131, %s132
      %p143 = scmp.eq.s32.totalorder %s22, 0
      %p144 = por %p142, %p143
      %p145 = scmp.ne.s32.totalorder %s131, %s132
      %p146 = scmp.eq.s32.totalorder %s23, 11
      %p147 = por %p145, %p146
      %p149 = scmp.ne.s32.totalorder %s132, %s148
      %p150 = scmp.eq.s32.totalorder %s23, 0
      %p151 = por %p149, %p150
      %s152 = ssub.s32 %s24, %s43
      %p153 = scmp.eq.s32.totalorder %s152, 0
      %s155 = sadd.s32 %s154, 1
      %s156 = scalar_select %p153, %s154, %s155
      %p159 = pneg %p153
      %p160 = scmp.eq.s32.totalorder %s17, 11
      %p161 = por %p159, %p160
      %p162 = scmp.ne.s32.totalorder %s154, %s157
      %p163 = scmp.eq.s32.totalorder %s17, 0
      %p164 = por %p162, %p163
      %p165 = scmp.ne.s32.totalorder %s154, %s157
      %p166 = scmp.eq.s32.totalorder %s22, 11
      %p167 = por %p165, %p166
      %p168 = scmp.ne.s32.totalorder %s157, %s158
      %p169 = scmp.eq.s32.totalorder %s22, 0
      %p170 = por %p168, %p169
      %p171 = scmp.ne.s32.totalorder %s157, %s158
      %p172 = scmp.eq.s32.totalorder %s23, 11
      %p173 = por %p171, %p172
      %p175 = scmp.ne.s32.totalorder %s158, %s174
      %p176 = scmp.eq.s32.totalorder %s23, 0
      %p177 = por %p175, %p176
      %s178 = ssub.s32 %s25, %s39
      %s179 = ssub.s32 %s24, %s43
      %s180 = sor.u32 %s178, %s179
      %p181 = scmp.eq.s32.totalorder %s180, 0
      %s183 = sadd.s32 %s182, 1
      %s184 = scalar_select %p181, %s182, %s183
      %p187 = pneg %p181
      %p188 = scmp.eq.s32.totalorder %s17, 11
      %p189 = por %p187, %p188
      %p190 = scmp.ne.s32.totalorder %s182, %s185
      %p191 = scmp.eq.s32.totalorder %s17, 0
      %p192 = por %p190, %p191
      %p193 = scmp.ne.s32.totalorder %s182, %s185
      %p194 = scmp.eq.s32.totalorder %s22, 11
      %p195 = por %p193, %p194
      %p196 = scmp.ne.s32.totalorder %s185, %s186
      %p197 = scmp.eq.s32.totalorder %s22, 0
      %p198 = por %p196, %p197
      %p199 = scmp.ne.s32.totalorder %s185, %s186
      %p200 = scmp.eq.s32.totalorder %s23, 11
      %p201 = por %p199, %p200
      %p203 = scmp.ne.s32.totalorder %s186, %s202
      %p204 = scmp.eq.s32.totalorder %s23, 0
      %p205 = por %p203, %p204
      %p206 = scmp.le.s32.totalorder 1, %s17
      %p207 = scmp.lt.s32.totalorder %s17, 13
      %p208 = pnand %p206, %p207
      %p209 = pneg %p208
      // Predicated region
      $region9: #{tpu_custom_call.1} parent=5 // pred_check
        _
      $region10: #{tpu_custom_call.1} parent=5 // pred_check_branch
        %211 = sbr.rel (%p208) target = $region12
      $region11: #{tpu_custom_call.1} parent=5 // pred_region
        %s212 = ssub.s32 %s17, 1
      $region12: #{tpu_custom_call.1} parent=5 // pred_fallthru
        _
      %p213 = scmp.lt.s32.totalorder %s17, 12
      // Predicated region
      $region13: #{tpu_custom_call.1} parent=5 // pred_check
        %p214 = pneg %p213
      $region14: #{tpu_custom_call.1} parent=5 // pred_check_branch
        %216 = sbr.rel (%p214) target = $region16
      $region15: #{tpu_custom_call.1} parent=5 // pred_region
        // Predicated region
        $region17: #{tpu_custom_call.1} parent=15 // pred_check
          %p217 = pneg %p58
        $region18: #{tpu_custom_call.1} parent=15 // pred_check_branch
          %219 = sbr.rel (%p217) target = $region20
        $region19: #{tpu_custom_call.1} parent=15 // pred_region
          %s220 = sand.u32 %s48, 1
          %s221 = scalar_lea.sflag [#allocation3], %s220
          %s222 = sand.u32 %s48, 1
          %s223 = smul.addr %s222, 8
          %s224 = scalar_lea.vmem [#allocation2], %s223
          %s225 = smul.u32 2, %s25
          %227 = vsyncadd %s221, 0
          %s228 = smul.addr %s225, 2
          %s229 = sadd.s32 %s26, %s228
          %s230 = smul.addr %s229, 4
          %s231 = scalar_lea.hbm %s0, %s230
          %s232 = sshll.u32 %s231, 4
          %s233 = int_to_ptr.hbm [resolvable:$true] %s232
          %s234 = sshll.u32 %s224, 4
          %s235 = int_to_ptr.vmem [resolvable:$true] %s234
          %240 = dma.hbm_to_vmem [thread:$0]  %s233, 128, %s235, %s221, 128, 64, 4
        $region20: #{tpu_custom_call.1} parent=15 // pred_fallthru
          _
        // Predicated region
        $region21: #{tpu_custom_call.1} parent=15 // pred_check
          %p241 = pneg %p86
        $region22: #{tpu_custom_call.1} parent=15 // pred_check_branch
          %243 = sbr.rel (%p241) target = $region24
        $region23: #{tpu_custom_call.1} parent=15 // pred_region
          %s244 = sand.u32 %s76, 1
          %s245 = sand.u32 %s76, 1
          %s246 = smul.addr %s245, 64
          %s247 = scalar_lea.vmem [#allocation5], %s246
          %s248 = smul.u32 16, %s26
          %s249 = smul.addr %s248, 2
          %s250 = sadd.s32 %s24, %s249
          %s251 = smul.addr %s250, 4
          %s252 = scalar_lea.vmem %s1, %s251
          // Predicated region
          $region25: #{tpu_custom_call.1} parent=23 // pred_check
            _
          $region26: #{tpu_custom_call.1} parent=23 // pred_check_branch
            %254 = sbr.rel (0) target = $region28
          $region27: #{tpu_custom_call.1} parent=23 // pred_region
            // Predicated region
            $region29: #{tpu_custom_call.1} parent=27 // pred_check
              _
            $region30: #{tpu_custom_call.1} parent=27 // pred_check_branch
              %256 = sbr.rel target = $region32
            $region31: #{tpu_custom_call.1} parent=27 // pred_region
              // Predicated region
              $region44: #{tpu_custom_call.1} parent=31 // pred_check
                _
              $region45: #{tpu_custom_call.1} parent=31 // pred_check_branch
                %302 = sbr.rel (0) target = $region47
              $region46: #{tpu_custom_call.1} parent=31 // pred_region
                loop: start=0, step=1, limit=1
                $region48: #{tpu_custom_call.1} parent=46 // loop_pre_header
                  _
                $region49: #{tpu_custom_call.1} parent=46 // loop_header
                  %s304 = sphi 0, %s308
                  %p305 = scmp.ge.s32.totalorder %s304, 1
                  %s309 = sphi %s252, %s252
                  %s310 = sphi %s247, %s247
                $region50: #{tpu_custom_call.1} parent=46 // loop_header_branch
                  %307 = sbr.rel (%p305) target = $region54
                $region51: #{tpu_custom_call.1} parent=46 // loop_body
                  _
                $region52: #{tpu_custom_call.1} parent=46 // loop_footer
                  %s308 = sadd.s32 1, %s304
                $region53: #{tpu_custom_call.1} parent=46 // loop_footer_branch
                  %303 = sbr.rel target = $region49
                $region54: #{tpu_custom_call.1} parent=46 // loop_exit
                  _
                %s312 = ssub.s32 16, 1
                loop: start=0, step=1, limit=1
                $region55: #{tpu_custom_call.1} parent=46 // loop_pre_header
                  _
                $region56: #{tpu_custom_call.1} parent=46 // loop_header
                  %s314 = sphi 0, %s318
                  %p315 = scmp.ge.s32.totalorder %s314, 1
                  %s319 = sphi %s252, %s252
                  %s320 = sphi %s247, %s247
                $region57: #{tpu_custom_call.1} parent=46 // loop_header_branch
                  %317 = sbr.rel (%p315) target = $region61
                $region58: #{tpu_custom_call.1} parent=46 // loop_body
                  %v321 = vld [vmem:[%s319] sm:%s312]
                  %322 = vst [vmem:[%s320] sm:%s312] %v321
                  %v323 = vld [vmem:[%s319 + $0x8] sm:%s312]
                  %324 = vst [vmem:[%s320 + $0x4] sm:%s312] %v323
                  %v325 = vld [vmem:[%s319 + $0x10] sm:%s312]
                  %326 = vst [vmem:[%s320 + $0x8] sm:%s312] %v325
                  %v327 = vld [vmem:[%s319 + $0x18] sm:%s312]
                  %328 = vst [vmem:[%s320 + $0xc] sm:%s312] %v327
                  %v329 = vld [vmem:[%s319 + $0x20] sm:%s312]
                  %330 = vst [vmem:[%s320 + $0x10] sm:%s312] %v329
                  %v331 = vld [vmem:[%s319 + $0x28] sm:%s312]
                  %332 = vst [vmem:[%s320 + $0x14] sm:%s312] %v331
                  %v333 = vld [vmem:[%s319 + $0x30] sm:%s312]
                  %334 = vst [vmem:[%s320 + $0x18] sm:%s312] %v333
                  %v335 = vld [vmem:[%s319 + $0x38] sm:%s312]
                  %336 = vst [vmem:[%s320 + $0x1c] sm:%s312] %v335
                  %v337 = vld [vmem:[%s319 + $0x40] sm:%s312]
                  %338 = vst [vmem:[%s320 + $0x20] sm:%s312] %v337
                  %v339 = vld [vmem:[%s319 + $0x48] sm:%s312]
                  %340 = vst [vmem:[%s320 + $0x24] sm:%s312] %v339
                  %v341 = vld [vmem:[%s319 + $0x50] sm:%s312]
                  %342 = vst [vmem:[%s320 + $0x28] sm:%s312] %v341
                  %v343 = vld [vmem:[%s319 + $0x58] sm:%s312]
                  %344 = vst [vmem:[%s320 + $0x2c] sm:%s312] %v343
                  %v345 = vld [vmem:[%s319 + $0x60] sm:%s312]
                  %346 = vst [vmem:[%s320 + $0x30] sm:%s312] %v345
                  %v347 = vld [vmem:[%s319 + $0x68] sm:%s312]
                  %348 = vst [vmem:[%s320 + $0x34] sm:%s312] %v347
                  %v349 = vld [vmem:[%s319 + $0x70] sm:%s312]
                  %350 = vst [vmem:[%s320 + $0x38] sm:%s312] %v349
                  %v351 = vld [vmem:[%s319 + $0x78] sm:%s312]
                  %352 = vst [vmem:[%s320 + $0x3c] sm:%s312] %v351
                $region59: #{tpu_custom_call.1} parent=46 // loop_footer
                  %s318 = sadd.s32 1, %s314
                $region60: #{tpu_custom_call.1} parent=46 // loop_footer_branch
                  %313 = sbr.rel target = $region56
                $region61: #{tpu_custom_call.1} parent=46 // loop_exit
                  _
              $region47: #{tpu_custom_call.1} parent=31 // pred_fallthru
                _
            $region32: #{tpu_custom_call.1} parent=27 // pred_fallthru
              _
            // Predicated region
            $region33: #{tpu_custom_call.1} parent=27 // pred_check
              _
            $region34: #{tpu_custom_call.1} parent=27 // pred_check_branch
              %258 = sbr.rel (0) target = $region36
            $region35: #{tpu_custom_call.1} parent=27 // pred_region
              %s260 = ssub.s32 16, 1
              loop: start=0, step=1, limit=1
              $region37: #{tpu_custom_call.1} parent=35 // loop_pre_header
                _
              $region38: #{tpu_custom_call.1} parent=35 // loop_header
                %s262 = sphi 0, %s266
                %p263 = scmp.ge.s32.totalorder %s262, 1
                %s267 = sphi %s252, %s252
                %s268 = sphi %s247, %s247
              $region39: #{tpu_custom_call.1} parent=35 // loop_header_branch
                %265 = sbr.rel (%p263) target = $region43
              $region40: #{tpu_custom_call.1} parent=35 // loop_body
                %v269 = vld [vmem:[%s267] sm:%s260]
                %270 = vst [vmem:[%s268] sm:%s260] %v269
                %v271 = vld [vmem:[%s267 + $0x8] sm:%s260]
                %272 = vst [vmem:[%s268 + $0x4] sm:%s260] %v271
                %v273 = vld [vmem:[%s267 + $0x10] sm:%s260]
                %274 = vst [vmem:[%s268 + $0x8] sm:%s260] %v273
                %v275 = vld [vmem:[%s267 + $0x18] sm:%s260]
                %276 = vst [vmem:[%s268 + $0xc] sm:%s260] %v275
                %v277 = vld [vmem:[%s267 + $0x20] sm:%s260]
                %278 = vst [vmem:[%s268 + $0x10] sm:%s260] %v277
                %v279 = vld [vmem:[%s267 + $0x28] sm:%s260]
                %280 = vst [vmem:[%s268 + $0x14] sm:%s260] %v279
                %v281 = vld [vmem:[%s267 + $0x30] sm:%s260]
                %282 = vst [vmem:[%s268 + $0x18] sm:%s260] %v281
                %v283 = vld [vmem:[%s267 + $0x38] sm:%s260]
                %284 = vst [vmem:[%s268 + $0x1c] sm:%s260] %v283
                %v285 = vld [vmem:[%s267 + $0x40] sm:%s260]
                %286 = vst [vmem:[%s268 + $0x20] sm:%s260] %v285
                %v287 = vld [vmem:[%s267 + $0x48] sm:%s260]
                %288 = vst [vmem:[%s268 + $0x24] sm:%s260] %v287
                %v289 = vld [vmem:[%s267 + $0x50] sm:%s260]
                %290 = vst [vmem:[%s268 + $0x28] sm:%s260] %v289
                %v291 = vld [vmem:[%s267 + $0x58] sm:%s260]
                %292 = vst [vmem:[%s268 + $0x2c] sm:%s260] %v291
                %v293 = vld [vmem:[%s267 + $0x60] sm:%s260]
                %294 = vst [vmem:[%s268 + $0x30] sm:%s260] %v293
                %v295 = vld [vmem:[%s267 + $0x68] sm:%s260]
                %296 = vst [vmem:[%s268 + $0x34] sm:%s260] %v295
                %v297 = vld [vmem:[%s267 + $0x70] sm:%s260]
                %298 = vst [vmem:[%s268 + $0x38] sm:%s260] %v297
                %v299 = vld [vmem:[%s267 + $0x78] sm:%s260]
                %300 = vst [vmem:[%s268 + $0x3c] sm:%s260] %v299
              $region41: #{tpu_custom_call.1} parent=35 // loop_footer
                %s266 = sadd.s32 1, %s262
              $region42: #{tpu_custom_call.1} parent=35 // loop_footer_branch
                %261 = sbr.rel target = $region38
              $region43: #{tpu_custom_call.1} parent=35 // loop_exit
                _
            $region36: #{tpu_custom_call.1} parent=27 // pred_fallthru
              _
          $region28: #{tpu_custom_call.1} parent=23 // pred_fallthru
            _
          %353 = vnop
        $region24: #{tpu_custom_call.1} parent=15 // pred_fallthru
          _
        // Predicated region
        $region62: #{tpu_custom_call.1} parent=15 // pred_check
          %p354 = pneg %p112
        $region63: #{tpu_custom_call.1} parent=15 // pred_check_branch
          %356 = sbr.rel (%p354) target = $region65
        $region64: #{tpu_custom_call.1} parent=15 // pred_region
          %s357 = smul.u32 16, %s26
          %p358 = scmp.lt.s32.totalorder %s357, 31
          %s359 = scalar_select %p358, %s357, 31
          %s360 = smul.addr %s359, 8
          %s361 = scalar_lea.vmem %s2, %s360
          %s362 = smul.u32 16, %s26
        $region65: #{tpu_custom_call.1} parent=15 // pred_fallthru
          _
        // Predicated region
        $region66: #{tpu_custom_call.1} parent=15 // pred_check
          %p363 = pneg %p138
        $region67: #{tpu_custom_call.1} parent=15 // pred_check_branch
          %365 = sbr.rel (%p363) target = $region69
        $region68: #{tpu_custom_call.1} parent=15 // pred_region
          %p366 = scmp.lt.s32.totalorder %s24, 1
          %s367 = scalar_select %p366, %s24, 1
          %s368 = scalar_lea.vmem %s3, %s367
        $region69: #{tpu_custom_call.1} parent=15 // pred_fallthru
          _
        // Predicated region
        $region70: #{tpu_custom_call.1} parent=15 // pred_check
          %p369 = pneg %p164
        $region71: #{tpu_custom_call.1} parent=15 // pred_check_branch
          %371 = sbr.rel (%p369) target = $region73
        $region72: #{tpu_custom_call.1} parent=15 // pred_region
          %p372 = scmp.lt.s32.totalorder %s24, 1
          %s373 = scalar_select %p372, %s24, 1
          %s374 = scalar_lea.vmem %s4, %s373
        $region73: #{tpu_custom_call.1} parent=15 // pred_fallthru
          _
      $region16: #{tpu_custom_call.1} parent=5 // pred_fallthru
        _
      %p375 = scmp.le.s32.totalorder 1, %s17
      %p376 = scmp.lt.s32.totalorder %s17, 13
      %p377 = pnand %p375, %p376
      %p378 = pneg %p377
      // Predicated region
      $region74: #{tpu_custom_call.1} parent=5 // pred_check
        _
      $region75: #{tpu_custom_call.1} parent=5 // pred_check_branch
        %380 = sbr.rel (%p377) target = $region77
      $region76: #{tpu_custom_call.1} parent=5 // pred_region
        %s381 = ssub.s32 %s17, 1
        %s382 = sand.u32 %s51, 1
        %s383 = scalar_lea.sflag [#allocation3], %s382
        %s384 = sand.u32 %s51, 1
        %s385 = smul.addr %s384, 8
        %s386 = scalar_lea.vmem [#allocation2], %s385
        // Predicated region
        $region78: #{tpu_custom_call.1} parent=76 // pred_check
          %p387 = pneg %p64
        $region79: #{tpu_custom_call.1} parent=76 // pred_check_branch
          %389 = sbr.rel (%p387) target = $region81
        $region80: #{tpu_custom_call.1} parent=76 // pred_region
          %391 = dma.done %s383, 128
        $region81: #{tpu_custom_call.1} parent=76 // pred_fallthru
          _
        %s392 = sand.u32 %s79, 1
        %s393 = sand.u32 %s79, 1
        %s394 = smul.addr %s393, 64
        %s395 = scalar_lea.vmem [#allocation5], %s394
        // Predicated region
        $region82: #{tpu_custom_call.1} parent=76 // pred_check
          %p396 = pneg %p92
        $region83: #{tpu_custom_call.1} parent=76 // pred_check_branch
          %398 = sbr.rel (%p396) target = $region85
        $region84: #{tpu_custom_call.1} parent=76 // pred_region
          _
        $region85: #{tpu_custom_call.1} parent=76 // pred_fallthru
          _
        %s399 = sand.u32 %s51, 1
        %s400 = scalar_lea.sflag [#allocation3], %s399
        %s401 = sand.u32 %s51, 1
        %s402 = smul.addr %s401, 8
        %s403 = scalar_lea.vmem [#allocation2], %s402
        %p404 = pneg %p64
        %p405 = pneg %p61
        %s406 = sand.u32 %s79, 1
        %s407 = sand.u32 %s79, 1
        %s408 = smul.addr %s407, 64
        %s409 = scalar_lea.vmem [#allocation5], %s408
        %p410 = pneg %p92
        %p411 = pneg %p89
        %s412 = smul.u32 16, %s29
        %p413 = scmp.lt.s32.totalorder %s412, 31
        %s414 = scalar_select %p413, %s412, 31
        %s415 = smul.addr %s414, 8
        %s416 = scalar_lea.vmem %s2, %s415
        %p417 = pneg %p118
        %p418 = pneg %p115
        %p419 = scmp.lt.s32.totalorder %s27, 1
        %s420 = scalar_select %p419, %s27, 1
        %s421 = scalar_lea.vmem %s3, %s420
        %p422 = pneg %p144
        %p423 = pneg %p141
        %p424 = scmp.lt.s32.totalorder %s27, 1
        %s425 = scalar_select %p424, %s27, 1
        %s426 = scalar_lea.vmem %s4, %s425
        %p427 = pneg %p170
        %p428 = pneg %p167
        %p429 = pneg %p198
        %p430 = pneg %p195
        %s431 = sand.u32 %s185, 1
        %s432 = scalar_lea.sflag [#allocation4], %s431
        %s433 = sand.u32 %s185, 1
        %s434 = smul.addr %s433, 16
        %s435 = scalar_lea.vmem [#allocation6], %s434
        %s436 = smul.u32 2, %s28
        %s437 = smul.u32 16, %s29
        %s438 = smul.u32 16, %s29
        %p439 = scmp.lt.s32.totalorder %s438, 31
        %s440 = scalar_select %p439, %s438, 31
        %s441 = smul.addr %s440, 8
        %s442 = scalar_lea.vmem %s2, %s441
        %s443 = smul.u32 16, %s29
        %p444 = scmp.lt.s32.totalorder %s27, 1
        %s445 = scalar_select %p444, %s27, 1
        %s446 = scalar_lea.vmem %s3, %s445
        %p447 = scmp.lt.s32.totalorder %s27, 1
        %s448 = scalar_select %p447, %s27, 1
        %s449 = scalar_lea.vmem %s4, %s448
        %s450 = smul.u32 2, %s28
        %p451 = scmp.eq.s32.totalorder %s29, 0
        // Predicated region
        $region86: #{tpu_custom_call.1} parent=76 // pred_check
          %p452 = pneg %p451
        $region87: #{tpu_custom_call.1} parent=76 // pred_check_branch
          %454 = sbr.rel (%p452) target = $region89
        $region88: #{tpu_custom_call.1} parent=76 // pred_region
          %v455 = vld [vmem:[%s449] sm:$0x1]
          %v457 = vperm.slane %v455, 0
          %459 = vst [vmem:[%s435] sm:$0xff] %v457
          %460 = vst [vmem:[%s435 + $0x8] sm:$0xff] %v457
        $region89: #{tpu_custom_call.1} parent=76 // pred_fallthru
          _
        %v461 = vld [vmem:[%s442] sm:$0xff]
        %v462 = vld [vmem:[%s442 + $0x8] sm:$0xff]
        %v463 = vld [vmem:[%s442 + $0x10] sm:$0xff]
        %v464 = vld [vmem:[%s442 + $0x18] sm:$0xff]
        %v465 = vld [vmem:[%s442 + $0x20] sm:$0xff]
        %v466 = vld [vmem:[%s442 + $0x28] sm:$0xff]
        %v467 = vld [vmem:[%s442 + $0x30] sm:$0xff]
        %v468 = vld [vmem:[%s442 + $0x38] sm:$0xff]
        %v469 = vld [vmem:[%s442 + $0x40] sm:$0xff]
        %v470 = vld [vmem:[%s442 + $0x48] sm:$0xff]
        %v471 = vld [vmem:[%s442 + $0x50] sm:$0xff]
        %v472 = vld [vmem:[%s442 + $0x58] sm:$0xff]
        %v473 = vld [vmem:[%s442 + $0x60] sm:$0xff]
        %v474 = vld [vmem:[%s442 + $0x68] sm:$0xff]
        %v475 = vld [vmem:[%s442 + $0x70] sm:$0xff]
        %v476 = vld [vmem:[%s442 + $0x78] sm:$0xff]
        %v477 = vld [vmem:[%s446] sm:$0x1]
        %v478 = vsub.f32 %v477, 1.0
        %480 = vset.pattern.permute.xlu0 0
        %481 = vperm.xlu0 %480, %v461
        %v482 = vpop.permute.xlu0 %481
        %485 = vset.pattern.permute.xlu0 0
        %486 = vperm.xlu0 %485, %v462
        %v487 = vpop.permute.xlu0 %486
        %490 = vset.pattern.permute.xlu0 0
        %491 = vperm.xlu0 %490, %v463
        %v492 = vpop.permute.xlu0 %491
        %495 = vset.pattern.permute.xlu0 0
        %496 = vperm.xlu0 %495, %v464
        %v497 = vpop.permute.xlu0 %496
        %500 = vset.pattern.permute.xlu0 0
        %501 = vperm.xlu0 %500, %v465
        %v502 = vpop.permute.xlu0 %501
        %505 = vset.pattern.permute.xlu0 0
        %506 = vperm.xlu0 %505, %v466
        %v507 = vpop.permute.xlu0 %506
        %510 = vset.pattern.permute.xlu0 0
        %511 = vperm.xlu0 %510, %v467
        %v512 = vpop.permute.xlu0 %511
        %515 = vset.pattern.permute.xlu0 0
        %516 = vperm.xlu0 %515, %v468
        %v517 = vpop.permute.xlu0 %516
        %520 = vset.pattern.permute.xlu0 0
        %521 = vperm.xlu0 %520, %v469
        %v522 = vpop.permute.xlu0 %521
        %525 = vset.pattern.permute.xlu0 0
        %526 = vperm.xlu0 %525, %v470
        %v527 = vpop.permute.xlu0 %526
        %530 = vset.pattern.permute.xlu0 0
        %531 = vperm.xlu0 %530, %v471
        %v532 = vpop.permute.xlu0 %531
        %535 = vset.pattern.permute.xlu0 0
        %536 = vperm.xlu0 %535, %v472
        %v537 = vpop.permute.xlu0 %536
        %540 = vset.pattern.permute.xlu0 0
        %541 = vperm.xlu0 %540, %v473
        %v542 = vpop.permute.xlu0 %541
        %545 = vset.pattern.permute.xlu0 0
        %546 = vperm.xlu0 %545, %v474
        %v547 = vpop.permute.xlu0 %546
        %550 = vset.pattern.permute.xlu0 0
        %551 = vperm.xlu0 %550, %v475
        %v552 = vpop.permute.xlu0 %551
        %555 = vset.pattern.permute.xlu0 0
        %556 = vperm.xlu0 %555, %v476
        %v557 = vpop.permute.xlu0 %556
        %v560 = vperm.slane %v478, 0
        %v562 = vmul.f32 %v482, %v560
        %v563 = vmul.f32 %v487, %v560
        %v564 = vmul.f32 %v492, %v560
        %v565 = vmul.f32 %v497, %v560
        %v566 = vmul.f32 %v502, %v560
        %v567 = vmul.f32 %v507, %v560
        %v568 = vmul.f32 %v512, %v560
        %v569 = vmul.f32 %v517, %v560
        %v570 = vmul.f32 %v522, %v560
        %v571 = vmul.f32 %v527, %v560
        %v572 = vmul.f32 %v532, %v560
        %v573 = vmul.f32 %v537, %v560
        %v574 = vmul.f32 %v542, %v560
        %v575 = vmul.f32 %v547, %v560
        %v576 = vmul.f32 %v552, %v560
        %v577 = vmul.f32 %v557, %v560
        %v578 = vadd.f32 %v562, 1.0
        %v579 = vadd.f32 %v563, 1.0
        %v580 = vadd.f32 %v564, 1.0
        %v581 = vadd.f32 %v565, 1.0
        %v582 = vadd.f32 %v566, 1.0
        %v583 = vadd.f32 %v567, 1.0
        %v584 = vadd.f32 %v568, 1.0
        %v585 = vadd.f32 %v569, 1.0
        %v586 = vadd.f32 %v570, 1.0
        %v587 = vadd.f32 %v571, 1.0
        %v588 = vadd.f32 %v572, 1.0
        %v589 = vadd.f32 %v573, 1.0
        %v590 = vadd.f32 %v574, 1.0
        %v591 = vadd.f32 %v575, 1.0
        %v592 = vadd.f32 %v576, 1.0
        %v593 = vadd.f32 %v577, 1.0
        %v594 = vld [vmem:[%s395] sm:$0xf]
        %v595 = vld [vmem:[%s395 + $0x4] sm:$0xf]
        %v596 = vld [vmem:[%s395 + $0x8] sm:$0xf]
        %v597 = vld [vmem:[%s395 + $0xc] sm:$0xf]
        %v598 = vld [vmem:[%s395 + $0x10] sm:$0xf]
        %v599 = vld [vmem:[%s395 + $0x14] sm:$0xf]
        %v600 = vld [vmem:[%s395 + $0x18] sm:$0xf]
        %v601 = vld [vmem:[%s395 + $0x1c] sm:$0xf]
        %v602 = vld [vmem:[%s395 + $0x20] sm:$0xf]
        %v603 = vld [vmem:[%s395 + $0x24] sm:$0xf]
        %v604 = vld [vmem:[%s395 + $0x28] sm:$0xf]
        %v605 = vld [vmem:[%s395 + $0x2c] sm:$0xf]
        %v606 = vld [vmem:[%s395 + $0x30] sm:$0xf]
        %v607 = vld [vmem:[%s395 + $0x34] sm:$0xf]
        %v608 = vld [vmem:[%s395 + $0x38] sm:$0xf]
        %v609 = vld [vmem:[%s395 + $0x3c] sm:$0xf]
        %v610 = vunpack.c.l.bf16 %v594
        %v611 = vunpack.c.l.bf16 %v595
        %v612 = vunpack.c.l.bf16 %v596
        %v613 = vunpack.c.l.bf16 %v597
        %v614 = vunpack.c.l.bf16 %v598
        %v615 = vunpack.c.l.bf16 %v599
        %v616 = vunpack.c.l.bf16 %v600
        %v617 = vunpack.c.l.bf16 %v601
        %v618 = vunpack.c.l.bf16 %v602
        %v619 = vunpack.c.l.bf16 %v603
        %v620 = vunpack.c.l.bf16 %v604
        %v621 = vunpack.c.l.bf16 %v605
        %v622 = vunpack.c.l.bf16 %v606
        %v623 = vunpack.c.l.bf16 %v607
        %v624 = vunpack.c.l.bf16 %v608
        %v625 = vunpack.c.l.bf16 %v609
        %v626 = vmul.f32 %v610, %v578
        %v627 = vmul.f32 %v611, %v579
        %v628 = vmul.f32 %v612, %v580
        %v629 = vmul.f32 %v613, %v581
        %v630 = vmul.f32 %v614, %v582
        %v631 = vmul.f32 %v615, %v583
        %v632 = vmul.f32 %v616, %v584
        %v633 = vmul.f32 %v617, %v585
        %v634 = vmul.f32 %v618, %v586
        %v635 = vmul.f32 %v619, %v587
        %v636 = vmul.f32 %v620, %v588
        %v637 = vmul.f32 %v621, %v589
        %v638 = vmul.f32 %v622, %v590
        %v639 = vmul.f32 %v623, %v591
        %v640 = vmul.f32 %v624, %v592
        %v641 = vmul.f32 %v625, %v593
        %v642 = vpack.c.bf16 %v627, %v626
        %v643 = vpack.c.bf16 %v629, %v628
        %v644 = vpack.c.bf16 %v631, %v630
        %v645 = vpack.c.bf16 %v633, %v632
        %v646 = vpack.c.bf16 %v635, %v634
        %v647 = vpack.c.bf16 %v637, %v636
        %v648 = vpack.c.bf16 %v639, %v638
        %v649 = vpack.c.bf16 %v641, %v640
        %v650 = vld [vmem:[%s435] sm:$0xff]
        %v651 = vld [vmem:[%s435 + $0x8] sm:$0xff]
        %v652 = vld [vmem:[%s386] sm:$0xf]
        %v653 = vld [vmem:[%s386 + $0x4] sm:$0xf]
        %v656 = vunpack.c.l.b16 %v652
        %v657 = vunpack.c.l.b16 %v653
        %v658 = vpack.c.b16 %v657, %v656
        %660 = vmatpush.bf16.msra.mxu0 %v649
        %661 = vmatpush.bf16.msra.mxu0 %v648
        %662 = vmatpush.bf16.msra.mxu0 %v647
        %663 = vmatpush.bf16.msra.mxu0 %v646
        %664 = vmatpush.bf16.msra.mxu0 %v645
        %665 = vmatpush.bf16.msra.mxu0 %v644
        %666 = vmatpush.bf16.msra.mxu0 %v643
        %667 = vmatpush.bf16.msra.mxu0 %v642
        %668 = vmatmul.bf16.gmra.mxu0 %v658
        %v669 = vpop.f32.mrf.mxu0
        %v670 = vadd.f32 0.0, %v669
        %v671 = vpop.f32.mrf.mxu0
        %v672 = vadd.f32 0.0, %v671
        %673 = vdwg.mxu0
        %v674 = vadd.f32 %v650, %v670
        %v675 = vadd.f32 %v651, %v672
        %676 = vst [vmem:[%s435] sm:$0xff] %v674
        %677 = vst [vmem:[%s435 + $0x8] sm:$0xff] %v675
        %s678 = sand.u32 %s185, 1
        %s679 = scalar_lea.sflag [#allocation4], %s678
        %s680 = sand.u32 %s185, 1
        %s681 = smul.addr %s680, 16
        %s682 = scalar_lea.vmem [#allocation6], %s681
        // Predicated region
        $region90: #{tpu_custom_call.1} parent=76 // pred_check
          %p683 = pneg %p195
        $region91: #{tpu_custom_call.1} parent=76 // pred_check_branch
          %685 = sbr.rel (%p683) target = $region93
        $region92: #{tpu_custom_call.1} parent=76 // pred_region
          %s686 = smul.u32 2, %s28
          %688 = vsyncadd %s679, 0
          %s689 = smul.addr %s686, 2
          %s690 = sadd.s32 %s27, %s689
          %s691 = smul.addr %s690, 8
          %s692 = scalar_lea.hbm %s5, %s691
          %s693 = sshll.u32 %s682, 4
          %s694 = int_to_ptr.vmem [resolvable:$true] %s693
          %s695 = sshll.u32 %s692, 4
          %s696 = int_to_ptr.hbm [resolvable:$true] %s695
          %701 = dma.vmem_to_hbm [thread:$0]  %s694, 256, %s696, %s679, 128, 256, 8
        $region93: #{tpu_custom_call.1} parent=76 // pred_fallthru
          _
      $region77: #{tpu_custom_call.1} parent=5 // pred_fallthru
        _
      %p702 = scmp.le.s32.totalorder 2, %s17
      // Predicated region
      $region94: #{tpu_custom_call.1} parent=5 // pred_check
        %p703 = pneg %p702
      $region95: #{tpu_custom_call.1} parent=5 // pred_check_branch
        %705 = sbr.rel (%p703) target = $region97
      $region96: #{tpu_custom_call.1} parent=5 // pred_region
        %s706 = ssub.s32 %s17, 2
        // Predicated region
        $region98: #{tpu_custom_call.1} parent=96 // pred_check
          %p707 = pneg %p201
        $region99: #{tpu_custom_call.1} parent=96 // pred_check_branch
          %709 = sbr.rel (%p707) target = $region101
        $region100: #{tpu_custom_call.1} parent=96 // pred_region
          %s710 = sand.u32 %s186, 1
          %s711 = scalar_lea.sflag [#allocation4], %s710
          %s712 = sand.u32 %s186, 1
          %s713 = smul.addr %s712, 16
          %s714 = scalar_lea.vmem [#allocation6], %s713
          %716 = dma.done %s711, 256
        $region101: #{tpu_custom_call.1} parent=96 // pred_fallthru
          _
      $region97: #{tpu_custom_call.1} parent=5 // pred_fallthru
        _
    $region6: #{tpu_custom_call.1} parent=1 // loop_footer
      %s21 = sadd.s32 1, %s17
    $region7: #{tpu_custom_call.1} parent=1 // loop_footer_branch
      %16 = sbr.rel target = $region3
    $region8: #{tpu_custom_call.1} parent=1 // loop_exit
      _
    %717 = vsyncpa [#allocation3], 1
    %s718 = scalar_lea.sflag [#allocation3], 1
    %719 = vsyncpa %s718, 1
    %720 = vsyncpa [#allocation4], 1
    %s721 = scalar_lea.sflag [#allocation4], 1
    %722 = vsyncpa %s721, 1

</llo_original>
